<compile_context>
chip_gen: v7x
topology: tpu7x:2x2x1
jax: 0.10.0
libtpu: 0.0.40
codegen_flags: <defaults>
</compile_context>

<pallas_src>
import jax
import jax.numpy as jnp
from jax import lax
from jax.experimental import pallas as pl
from jax.experimental.pallas import tpu as pltpu


def _round_up(x: int, m: int) -> int:
    return (x + m - 1) // m * m


def mlp_kernel(x_ref, w1_ref, b1_ref, w2_ref, b2_ref, o_ref):
    # x:  (TM, D_in)    f32
    # w1: (D_h, D_in)   bf16  (PyTorch layout, NOT pre-transposed)
    # b1: (1, D_h)      f32
    # w2: (D_out, D_h)  bf16
    # b2: (1, D_out)    f32
    cdt = w1_ref.dtype
    x = x_ref[...].astype(cdt)
    # fc1: contract x dim 1 with w1 dim 1  ==  x @ w1.T  -> (TM, D_h), f32 acc.
    h = lax.dot_general(x, w1_ref[...], (((1,), (1,)), ((), ())),
                        preferred_element_type=jnp.float32)
    h = h + b1_ref[...]
    # fc2: h @ w2.T -> (TM, D_out), f32 acc.
    out = lax.dot_general(h.astype(cdt), w2_ref[...], (((1,), (1,)), ((), ())),
                          preferred_element_type=jnp.float32)
    out = out + b2_ref[...]
    o_ref[...] = out.astype(o_ref.dtype)


def _pick_block_m(B, d_in_p, d_h_p, d_out_p, wbytes,
                  budget=48 * 1024 * 1024):
    """Largest batch tile (mult. of 8) whose working set fits the VMEM budget."""
    # Resident (constant index_map, double-buffered by default): weights+biases.
    resident = (2 * (d_h_p * d_in_p + d_out_p * d_h_p) * wbytes
                + 2 * (d_h_p + d_out_p) * 4)
    cap = _round_up(B, 8)
    candidates = [cap] + [c for c in (512, 256, 128, 64, 32, 16, 8) if c < cap]
    for tm in candidates:
        per_tile = (2 * tm * (d_in_p + d_out_p) * 4   # x / out double-buffered
                    + tm * d_h_p * 4                  # h intermediate (f32)
                    + tm * d_in_p * wbytes)           # x cast to compute dtype
        if resident + per_tile <= budget:
            return tm
    return 8


def simple_nn_forward(x, w1, b1, w2, b2, *, weight_dtype=jnp.bfloat16,
                      block_m=None):
    """Fused forward of SimpleNN: (x @ w1.T + b1) @ w2.T + b2.

    x: (B, D_in); w1: (D_h, D_in); b1: (D_h,); w2: (D_out, D_h); b2: (D_out,).
    """
    B, D_in = x.shape
    D_h = w1.shape[0]
    D_out = w2.shape[0]
    wbytes = jnp.dtype(weight_dtype).itemsize

    # Lane-dense padding: features -> multiples of 128, batch tile -> mult of 8.
    d_in_p = _round_up(D_in, 128)
    d_h_p = _round_up(D_h, 128)
    d_out_p = _round_up(D_out, 128)
    tm = block_m if block_m is not None else _pick_block_m(
        B, d_in_p, d_h_p, d_out_p, wbytes)
    tm = max(8, _round_up(min(tm, _round_up(B, 8)), 8))
    b_p = _round_up(B, tm)

    def pad2(a, r, c):
        return a if a.shape == (r, c) else jnp.pad(
            a, ((0, r - a.shape[0]), (0, c - a.shape[1])))

    x_p = pad2(x, b_p, d_in_p)
    w1_p = pad2(w1, d_h_p, d_in_p).astype(weight_dtype)
    w2_p = pad2(w2, d_out_p, d_h_p).astype(weight_dtype)
    b1_p = pad2(b1.reshape(1, D_h).astype(jnp.float32), 1, d_h_p)
    b2_p = pad2(b2.reshape(1, D_out).astype(jnp.float32), 1, d_out_p)

    cost = pl.CostEstimate(
        flops=2 * b_p * d_h_p * (d_in_p + d_out_p),
        transcendentals=0,
        bytes_accessed=(x_p.size * 4 + w1_p.size * wbytes + w2_p.size * wbytes
                        + b1_p.size * 4 + b2_p.size * 4 + b_p * d_out_p * 4))

    # VMEM budget: x/out tiles double-buffered; weights/biases have constant
    # index_maps (fetched once, but still allocate 2 buffers each).
    est_vmem = (2 * tm * (d_in_p + d_out_p) * 4
                + 2 * (d_h_p * d_in_p + d_out_p * d_h_p) * wbytes
                + 2 * (d_h_p + d_out_p) * 4
                + tm * d_h_p * 4
                + tm * d_in_p * wbytes)
    vmem_limit = int(min(64 * 1024 * 1024, max(32 * 1024 * 1024, 2 * est_vmem)))

    out_p = pl.pallas_call(
        mlp_kernel,
        out_shape=jax.ShapeDtypeStruct((b_p, d_out_p), x.dtype),
        grid=(b_p // tm,),
        in_specs=[
            pl.BlockSpec((tm, d_in_p), lambda i: (i, 0)),      # x: batch-tiled
            pl.BlockSpec((d_h_p, d_in_p), lambda i: (0, 0)),   # w1: resident
            pl.BlockSpec((1, d_h_p), lambda i: (0, 0)),        # b1: resident
            pl.BlockSpec((d_out_p, d_h_p), lambda i: (0, 0)),  # w2: resident
            pl.BlockSpec((1, d_out_p), lambda i: (0, 0)),      # b2: resident
        ],
        out_specs=pl.BlockSpec((tm, d_out_p), lambda i: (i, 0)),
        compiler_params=pltpu.CompilerParams(
            dimension_semantics=("parallel",),
            vmem_limit_bytes=vmem_limit),
        cost_estimate=cost,
    )(x_p, w1_p, b1_p, w2_p, b2_p)

    return out_p[:B, :D_out]


def init_linear_params(key, in_features, out_features, dtype=jnp.float32):
    """Deterministic init mimicking nn.Linear: U(-1/sqrt(in), 1/sqrt(in))."""
    k_w, k_b = jax.random.split(key)
    bound = 1.0 / jnp.sqrt(jnp.asarray(in_features, dtype))
    w = jax.random.uniform(k_w, (out_features, in_features), dtype,
                           minval=-bound, maxval=bound)
    b = jax.random.uniform(k_b, (out_features,), dtype,
                           minval=-bound, maxval=bound)
    return w, b


if __name__ == "__main__":
    # Small shapes consistent with the module (input_dim == hidden == output).
    batch = 8
    input_dim = 128
    output_dim = 128

    key = jax.random.PRNGKey(0)
    k_x, k_fc1, k_fc2 = jax.random.split(key, 3)

    x = jax.random.normal(k_x, (batch, input_dim), dtype=jnp.float32)
    w1, b1 = init_linear_params(k_fc1, input_dim, input_dim)
    w2, b2 = init_linear_params(k_fc2, input_dim, output_dim)

    fwd = jax.jit(simple_nn_forward)
    out = jax.block_until_ready(fwd(x, w1, b1, w2, b2))

    # Correctness check against plain-JAX f32 reference of the PyTorch forward.
    ref = (x @ w1.T + b1) @ w2.T + b2
    assert out.shape == (batch, output_dim)
    # bf16 weight path -> loosened tolerance vs f32 reference (f32 accumulation).
    assert jnp.allclose(out, ref, atol=2e-2, rtol=2e-2), float(
        jnp.max(jnp.abs(out - ref)))

    print("KERNEL_OK")
</pallas_src>

<mosaic_0001>
module attributes {stable_mosaic.version = 11 : i64} {
  func.func @mlp_kernel(%arg0: i32, %arg1: memref<8x128xf32, #tpu.memory_space<vmem>>, %arg2: memref<128x128xbf16, #tpu.memory_space<vmem>>, %arg3: memref<1x128xf32, #tpu.memory_space<vmem>>, %arg4: memref<128x128xbf16, #tpu.memory_space<vmem>>, %arg5: memref<1x128xf32, #tpu.memory_space<vmem>>, %arg6: memref<8x128xf32, #tpu.memory_space<vmem>>) attributes {dimension_semantics = [#tpu.dimension_semantics<parallel>], iteration_bounds = array<i64: 1>, scalar_prefetch = 0 : i64, scratch_operands = 0 : i64, tpu.core_type = #tpu.core_type<tc>, window_params = [{transform_indices = @transform_0, window_bounds = array<i64: 8, 128>}, {pipeline_mode = #tpu.pipeline_mode<synchronous>, transform_indices = @transform_1, window_bounds = array<i64: 128, 128>}, {pipeline_mode = #tpu.pipeline_mode<synchronous>, transform_indices = @transform_2, window_bounds = array<i64: 1, 128>}, {pipeline_mode = #tpu.pipeline_mode<synchronous>, transform_indices = @transform_3, window_bounds = array<i64: 128, 128>}, {pipeline_mode = #tpu.pipeline_mode<synchronous>, transform_indices = @transform_4, window_bounds = array<i64: 1, 128>}, {transform_indices = @transform_5, window_bounds = array<i64: 8, 128>}]} {
    %c0 = arith.constant 0 : index
    %c0_0 = arith.constant 0 : index
    %0 = vector.load %arg1[%c0, %c0_0] : memref<8x128xf32, #tpu.memory_space<vmem>>, vector<8x128xf32>
    %1 = arith.truncf %0 : vector<8x128xf32> to vector<8x128xbf16>
    %c0_1 = arith.constant 0 : index
    %c0_2 = arith.constant 0 : index
    %2 = vector.load %arg2[%c0_1, %c0_2] : memref<128x128xbf16, #tpu.memory_space<vmem>>, vector<128x128xbf16>
    %cst = arith.constant dense<0.000000e+00> : vector<8x128xf32>
    %3 = tpu.matmul %1, %2, %cst {dimension_numbers = #tpu.dot_dimension_numbers<[1], [1], [0], [0], [0, 0, 1, 0], [], []>} : vector<8x128xbf16>, vector<128x128xbf16>, vector<8x128xf32> -> vector<8x128xf32>
    %c0_3 = arith.constant 0 : index
    %c0_4 = arith.constant 0 : index
    %4 = vector.load %arg3[%c0_3, %c0_4] : memref<1x128xf32, #tpu.memory_space<vmem>>, vector<1x128xf32>
    %5 = vector.broadcast %4 : vector<1x128xf32> to vector<8x128xf32>
    %6 = arith.addf %3, %5 : vector<8x128xf32>
    %7 = arith.truncf %6 : vector<8x128xf32> to vector<8x128xbf16>
    %c0_5 = arith.constant 0 : index
    %c0_6 = arith.constant 0 : index
    %8 = vector.load %arg4[%c0_5, %c0_6] : memref<128x128xbf16, #tpu.memory_space<vmem>>, vector<128x128xbf16>
    %cst_7 = arith.constant dense<0.000000e+00> : vector<8x128xf32>
    %9 = tpu.matmul %7, %8, %cst_7 {dimension_numbers = #tpu.dot_dimension_numbers<[1], [1], [0], [0], [0, 0, 1, 0], [], []>} : vector<8x128xbf16>, vector<128x128xbf16>, vector<8x128xf32> -> vector<8x128xf32>
    %c0_8 = arith.constant 0 : index
    %c0_9 = arith.constant 0 : index
    %10 = vector.load %arg5[%c0_8, %c0_9] : memref<1x128xf32, #tpu.memory_space<vmem>>, vector<1x128xf32>
    %11 = vector.broadcast %10 : vector<1x128xf32> to vector<8x128xf32>
    %12 = arith.addf %9, %11 : vector<8x128xf32>
    %c0_10 = arith.constant 0 : index
    %c0_11 = arith.constant 0 : index
    %13 = vector.load %arg6[%c0_10, %c0_11] : memref<8x128xf32, #tpu.memory_space<vmem>>, vector<8x128xf32>
    tpu.vector_store %arg6[%c0_10, %c0_11], %12 {strides = array<i32>} : memref<8x128xf32, #tpu.memory_space<vmem>>, vector<8x128xf32>,
    return
  }
  func.func @transform_0(%arg0: i32) -> (i32, i32) {
    %c0_i32 = arith.constant 0 : i32
    %c0_i32_0 = arith.constant 0 : i32
    return %arg0, %c0_i32 : i32, i32
  }
  func.func @transform_1(%arg0: i32) -> (i32, i32) {
    %c0_i32 = arith.constant 0 : i32
    %c0_i32_0 = arith.constant 0 : i32
    %c0_i32_1 = arith.constant 0 : i32
    return %c0_i32, %c0_i32_0 : i32, i32
  }
  func.func @transform_2(%arg0: i32) -> (i32, i32) {
    %c0_i32 = arith.constant 0 : i32
    %c0_i32_0 = arith.constant 0 : i32
    %c0_i32_1 = arith.constant 0 : i32
    return %c0_i32, %c0_i32_0 : i32, i32
  }
  func.func @transform_3(%arg0: i32) -> (i32, i32) {
    %c0_i32 = arith.constant 0 : i32
    %c0_i32_0 = arith.constant 0 : i32
    %c0_i32_1 = arith.constant 0 : i32
    return %c0_i32, %c0_i32_0 : i32, i32
  }
  func.func @transform_4(%arg0: i32) -> (i32, i32) {
    %c0_i32 = arith.constant 0 : i32
    %c0_i32_0 = arith.constant 0 : i32
    %c0_i32_1 = arith.constant 0 : i32
    return %c0_i32, %c0_i32_0 : i32, i32
  }
  func.func @transform_5(%arg0: i32) -> (i32, i32) {
    %c0_i32 = arith.constant 0 : i32
    %c0_i32_0 = arith.constant 0 : i32
    return %arg0, %c0_i32 : i32, i32
  }
}

</mosaic_0001>

<llo_original>
// kernel: simple_nn_forward.1
$region0: #{simple_nn_forward.1}
  #allocation0 [shape = 'u32[]', space=smem, size = 0x4, offset = 0x4, fixed_abs, tag = 'smem constant byte address 0x4 - core index']
  #allocation1 [shape = 'u32[144,128]{1,0:T(1,128)}', space=vmem, size = 0x12000, scoped, tag = 'internal scratch']
  %s0 = inlined_call_operand.vmem [shape: f32[8,128], index: 0, kind: input, shape index: {}]
  %s1 = inlined_call_operand.vmem [shape: bf16[128,128], index: 1, kind: input, shape index: {}]
  %s2 = inlined_call_operand.vmem [shape: f32[1,128], index: 2, kind: input, shape index: {}]
  %s3 = inlined_call_operand.vmem [shape: bf16[128,128], index: 3, kind: input, shape index: {}]
  %s4 = inlined_call_operand.vmem [shape: f32[1,128], index: 4, kind: input, shape index: {}]
  %s5 = inlined_call_operand.hbm [shape: f32[8,128], index: 5, kind: output, shape index: {}]
  %s6 = sld [smem:[#allocation0]]
  $region30: #{simple_nn_forward.1} parent=0
    _
  %s8 = ssub.s32 1, %s6
  %s9 = scalar_select 0, %s8, %s6
  $region1: #{simple_nn_forward.1} parent=0
    #allocation2 [shape = 'u8[4096]{0}', space=vmem, size = 0x1000, scoped, tag = 'output window, operand 0, single buffered']
    #allocation3 [shape = 's32[1]{0}', space=sflag, size = 0x4, scoped, tag = 'scoped memory for simple_nn_forward.1']
    %10 = vsyncpa [#allocation3], 0
    // Predicated region
    $region2: #{simple_nn_forward.1} parent=1 // pred_check
      _
    $region3: #{simple_nn_forward.1} parent=1 // pred_check_branch
      %12 = sbr.rel (0) target = $region5
    $region4: #{simple_nn_forward.1} parent=1 // pred_region
      _
    $region5: #{simple_nn_forward.1} parent=1 // pred_fallthru
      _
    // Predicated region
    $region6: #{simple_nn_forward.1} parent=1 // pred_check
      _
    $region7: #{simple_nn_forward.1} parent=1 // pred_check_branch
      %14 = sbr.rel (0) target = $region9
    $region8: #{simple_nn_forward.1} parent=1 // pred_region
      _
    $region9: #{simple_nn_forward.1} parent=1 // pred_fallthru
      _
    // Predicated region
    $region10: #{simple_nn_forward.1} parent=1 // pred_check
      _
    $region11: #{simple_nn_forward.1} parent=1 // pred_check_branch
      %16 = sbr.rel (0) target = $region13
    $region12: #{simple_nn_forward.1} parent=1 // pred_region
      _
    $region13: #{simple_nn_forward.1} parent=1 // pred_fallthru
      _
    // Predicated region
    $region14: #{simple_nn_forward.1} parent=1 // pred_check
      _
    $region15: #{simple_nn_forward.1} parent=1 // pred_check_branch
      %18 = sbr.rel (0) target = $region17
    $region16: #{simple_nn_forward.1} parent=1 // pred_region
      _
    $region17: #{simple_nn_forward.1} parent=1 // pred_fallthru
      _
    // Predicated region
    $region18: #{simple_nn_forward.1} parent=1 // pred_check
      _
    $region19: #{simple_nn_forward.1} parent=1 // pred_check_branch
      %20 = sbr.rel (0) target = $region21
    $region20: #{simple_nn_forward.1} parent=1 // pred_region
      _
    $region21: #{simple_nn_forward.1} parent=1 // pred_fallthru
      _
    %v22 = vld [vmem:[%s0] sm:$0xff]
    %v23 = vpack.c.bf16 %v22, %v22
    %v24 = vld [vmem:[%s1] sm:$0xf]
    %v25 = vld [vmem:[%s1 + $0x4] sm:$0xf]
    %v26 = vld [vmem:[%s1 + $0x8] sm:$0xf]
    %v27 = vld [vmem:[%s1 + $0xc] sm:$0xf]
    %v28 = vld [vmem:[%s1 + $0x10] sm:$0xf]
    %v29 = vld [vmem:[%s1 + $0x14] sm:$0xf]
    %v30 = vld [vmem:[%s1 + $0x18] sm:$0xf]
    %v31 = vld [vmem:[%s1 + $0x1c] sm:$0xf]
    %v32 = vld [vmem:[%s1 + $0x20] sm:$0xf]
    %v33 = vld [vmem:[%s1 + $0x24] sm:$0xf]
    %v34 = vld [vmem:[%s1 + $0x28] sm:$0xf]
    %v35 = vld [vmem:[%s1 + $0x2c] sm:$0xf]
    %v36 = vld [vmem:[%s1 + $0x30] sm:$0xf]
    %v37 = vld [vmem:[%s1 + $0x34] sm:$0xf]
    %v38 = vld [vmem:[%s1 + $0x38] sm:$0xf]
    %v39 = vld [vmem:[%s1 + $0x3c] sm:$0xf]
    %v40 = vld [vmem:[%s2] sm:$0x1]
    %v42 = vlaneseq
    %v43 = vshrl.u32 %v42, 7
    %v44 = vsub.s32 0, %v43
    %v45 = vrot.slane %v40, %v44
    %v63 = vunpack.c.l.b16 %v24
    %v64 = vunpack.c.l.b16 %v25
    %v65 = vunpack.c.l.b16 %v26
    %v66 = vunpack.c.l.b16 %v27
    %v67 = vunpack.c.l.b16 %v28
    %v68 = vunpack.c.l.b16 %v29
    %v69 = vunpack.c.l.b16 %v30
    %v70 = vunpack.c.l.b16 %v31
    %v71 = vunpack.c.l.b16 %v32
    %v72 = vunpack.c.l.b16 %v33
    %v73 = vunpack.c.l.b16 %v34
    %v74 = vunpack.c.l.b16 %v35
    %v75 = vunpack.c.l.b16 %v36
    %v76 = vunpack.c.l.b16 %v37
    %v77 = vunpack.c.l.b16 %v38
    %v78 = vunpack.c.l.b16 %v39
    %v79 = vpack.c.b16 %v64, %v63
    %v80 = vpack.c.b16 %v66, %v65
    %v81 = vpack.c.b16 %v68, %v67
    %v82 = vpack.c.b16 %v70, %v69
    %v83 = vpack.c.b16 %v72, %v71
    %v84 = vpack.c.b16 %v74, %v73
    %v85 = vpack.c.b16 %v76, %v75
    %v86 = vpack.c.b16 %v78, %v77
    %95 = vmatprep.subr.bf16.mxu0 0
    %96 = vmatpush1.bf16.xpose.msra.mxu0 %v79
    %97 = vmatprep.subr.bf16.mxu0 0
    %98 = vmatpush1.bf16.xpose.msra.mxu0 %v80
    %99 = vmatprep.subr.bf16.mxu0 0
    %100 = vmatpush1.bf16.xpose.msra.mxu0 %v81
    %101 = vmatprep.subr.bf16.mxu0 0
    %102 = vmatpush1.bf16.xpose.msra.mxu0 %v82
    %103 = vmatprep.subr.bf16.mxu0 0
    %104 = vmatpush1.bf16.xpose.msra.mxu0 %v83
    %105 = vmatprep.subr.bf16.mxu0 0
    %106 = vmatpush1.bf16.xpose.msra.mxu0 %v84
    %107 = vmatprep.subr.bf16.mxu0 0
    %108 = vmatpush1.bf16.xpose.msra.mxu0 %v85
    %109 = vmatprep.subr.bf16.mxu0 0
    %110 = vmatpush1.bf16.xpose.msra.mxu0 %v86
    %111 = vmatprep.subr.bf16.mxu0 0
    %112 = vmatpush1.bf16.xpose.msra.mxu0 0
    %113 = vmatprep.subr.bf16.mxu0 0
    %114 = vmatpush1.bf16.xpose.msra.mxu0 0
    %115 = vmatprep.subr.bf16.mxu0 0
    %116 = vmatpush1.bf16.xpose.msra.mxu0 0
    %117 = vmatprep.subr.bf16.mxu0 0
    %118 = vmatpush1.bf16.xpose.msra.mxu0 0
    %119 = vmatprep.subr.bf16.mxu0 0
    %120 = vmatpush1.bf16.xpose.msra.mxu0 0
    %121 = vmatprep.subr.bf16.mxu0 0
    %122 = vmatpush1.bf16.xpose.msra.mxu0 0
    %123 = vmatprep.subr.bf16.mxu0 0
    %124 = vmatpush1.bf16.xpose.msra.mxu0 0
    %125 = vmatprep.subr.bf16.mxu0 0
    %126 = vmatpush1.bf16.xpose.msra.mxu0 0
    %127 = vmatprep.mubr.bf16.mxu0 0
    %128 = vmatmul.mubr.bf16.gmra.mrb[0].mxu0 %v23
    %v129 = vpop.f32.mrb[0].mxu0
    %v130 = vadd.f32 %v45, %v129
    %v131 = vpop.f32.mrb[0].mxu0
    %v132 = vpop.f32.mrb[0].mxu0
    %v133 = vpop.f32.mrb[0].mxu0
    %134 = vdwg.mxu0
    %v135 = vpack.c.bf16 %v130, %v130
    %v136 = vld [vmem:[%s3] sm:$0xf]
    %v137 = vld [vmem:[%s3 + $0x4] sm:$0xf]
    %v138 = vld [vmem:[%s3 + $0x8] sm:$0xf]
    %v139 = vld [vmem:[%s3 + $0xc] sm:$0xf]
    %v140 = vld [vmem:[%s3 + $0x10] sm:$0xf]
    %v141 = vld [vmem:[%s3 + $0x14] sm:$0xf]
    %v142 = vld [vmem:[%s3 + $0x18] sm:$0xf]
    %v143 = vld [vmem:[%s3 + $0x1c] sm:$0xf]
    %v144 = vld [vmem:[%s3 + $0x20] sm:$0xf]
    %v145 = vld [vmem:[%s3 + $0x24] sm:$0xf]
    %v146 = vld [vmem:[%s3 + $0x28] sm:$0xf]
    %v147 = vld [vmem:[%s3 + $0x2c] sm:$0xf]
    %v148 = vld [vmem:[%s3 + $0x30] sm:$0xf]
    %v149 = vld [vmem:[%s3 + $0x34] sm:$0xf]
    %v150 = vld [vmem:[%s3 + $0x38] sm:$0xf]
    %v151 = vld [vmem:[%s3 + $0x3c] sm:$0xf]
    %v152 = vld [vmem:[%s4] sm:$0x1]
    %v154 = vlaneseq
    %v155 = vshrl.u32 %v154, 7
    %v156 = vsub.s32 0, %v155
    %v157 = vrot.slane %v152, %v156
    %v175 = vunpack.c.l.b16 %v136
    %v176 = vunpack.c.l.b16 %v137
    %v177 = vunpack.c.l.b16 %v138
    %v178 = vunpack.c.l.b16 %v139
    %v179 = vunpack.c.l.b16 %v140
    %v180 = vunpack.c.l.b16 %v141
    %v181 = vunpack.c.l.b16 %v142
    %v182 = vunpack.c.l.b16 %v143
    %v183 = vunpack.c.l.b16 %v144
    %v184 = vunpack.c.l.b16 %v145
    %v185 = vunpack.c.l.b16 %v146
    %v186 = vunpack.c.l.b16 %v147
    %v187 = vunpack.c.l.b16 %v148
    %v188 = vunpack.c.l.b16 %v149
    %v189 = vunpack.c.l.b16 %v150
    %v190 = vunpack.c.l.b16 %v151
    %v191 = vpack.c.b16 %v176, %v175
    %v192 = vpack.c.b16 %v178, %v177
    %v193 = vpack.c.b16 %v180, %v179
    %v194 = vpack.c.b16 %v182, %v181
    %v195 = vpack.c.b16 %v184, %v183
    %v196 = vpack.c.b16 %v186, %v185
    %v197 = vpack.c.b16 %v188, %v187
    %v198 = vpack.c.b16 %v190, %v189
    %207 = vmatprep.subr.bf16.mxu0 0
    %208 = vmatpush1.bf16.xpose.msra.mxu0 %v191
    %209 = vmatprep.subr.bf16.mxu0 0
    %210 = vmatpush1.bf16.xpose.msra.mxu0 %v192
    %211 = vmatprep.subr.bf16.mxu0 0
    %212 = vmatpush1.bf16.xpose.msra.mxu0 %v193
    %213 = vmatprep.subr.bf16.mxu0 0
    %214 = vmatpush1.bf16.xpose.msra.mxu0 %v194
    %215 = vmatprep.subr.bf16.mxu0 0
    %216 = vmatpush1.bf16.xpose.msra.mxu0 %v195
    %217 = vmatprep.subr.bf16.mxu0 0
    %218 = vmatpush1.bf16.xpose.msra.mxu0 %v196
    %219 = vmatprep.subr.bf16.mxu0 0
    %220 = vmatpush1.bf16.xpose.msra.mxu0 %v197
    %221 = vmatprep.subr.bf16.mxu0 0
    %222 = vmatpush1.bf16.xpose.msra.mxu0 %v198
    %223 = vmatprep.subr.bf16.mxu0 0
    %224 = vmatpush1.bf16.xpose.msra.mxu0 0
    %225 = vmatprep.subr.bf16.mxu0 0
    %226 = vmatpush1.bf16.xpose.msra.mxu0 0
    %227 = vmatprep.subr.bf16.mxu0 0
    %228 = vmatpush1.bf16.xpose.msra.mxu0 0
    %229 = vmatprep.subr.bf16.mxu0 0
    %230 = vmatpush1.bf16.xpose.msra.mxu0 0
    %231 = vmatprep.subr.bf16.mxu0 0
    %232 = vmatpush1.bf16.xpose.msra.mxu0 0
    %233 = vmatprep.subr.bf16.mxu0 0
    %234 = vmatpush1.bf16.xpose.msra.mxu0 0
    %235 = vmatprep.subr.bf16.mxu0 0
    %236 = vmatpush1.bf16.xpose.msra.mxu0 0
    %237 = vmatprep.subr.bf16.mxu0 0
    %238 = vmatpush1.bf16.xpose.msra.mxu0 0
    %239 = vmatprep.mubr.bf16.mxu0 0
    %240 = vmatmul.mubr.bf16.gmra.mrb[0].mxu0 %v135
    %v241 = vpop.f32.mrb[0].mxu0
    %v242 = vadd.f32 %v157, %v241
    %v243 = vpop.f32.mrb[0].mxu0
    %v244 = vpop.f32.mrb[0].mxu0
    %v245 = vpop.f32.mrb[0].mxu0
    %246 = vdwg.mxu0
    %247 = vst [vmem:[#allocation2] sm:$0xff] %v242
    // Predicated region
    $region22: #{simple_nn_forward.1} parent=1 // pred_check
      _
    $region23: #{simple_nn_forward.1} parent=1 // pred_check_branch
      %249 = sbr.rel (0) target = $region25
    $region24: #{simple_nn_forward.1} parent=1 // pred_region
      %s251 = ssub.s32 128, 128
      %252 = vsyncadd [#allocation3], %s251
      %s254 = sshll.u32 [#allocation2], 4
      %s255 = int_to_ptr.vmem [resolvable:$true] %s254
      %257 = dma.vmem_to_hbm [thread:$0]  %s255, 128, %s5, [#allocation3]
    $region25: #{simple_nn_forward.1} parent=1 // pred_fallthru
      _
    // Predicated region
    $region26: #{simple_nn_forward.1} parent=1 // pred_check
      _
    $region27: #{simple_nn_forward.1} parent=1 // pred_check_branch
      %259 = sbr.rel (0) target = $region29
    $region28: #{simple_nn_forward.1} parent=1 // pred_region
      %260 = dma.done [#allocation3], 128
    $region29: #{simple_nn_forward.1} parent=1 // pred_fallthru
      _
    %261 = vsyncpa [#allocation3], 1

</llo_original>
